<compile_context>
chip_gen: v5e
topology: v5e:2x2
jax: 0.10.0
libtpu: 0.0.40
codegen_flags: <defaults>
</compile_context>

<pallas_src>
import jax
import jax.numpy as jnp
from jax.experimental import pallas as pl
from jax.experimental.pallas import tpu as pltpu


def _round_up(n, m):
    return ((n + m - 1) // m) * m


def mlp_kernel(x_ref, w1_ref, b1w2_ref, b2_ref, o_ref):
    # First linear on the MXU: (H, D) bf16 x (D, TB) bf16 -> (H, TB) f32.
    # Batch stays on the lane axis for the whole kernel.
    h = jnp.dot(w1_ref[...], x_ref[...], preferred_element_type=jnp.float32)

    b1 = b1w2_ref[:, 0:1]                         # (H, 1)
    w2 = b1w2_ref[:, 1:2]                         # (H, 1)
    h = jnp.maximum(h + b1, 0.0)                  # bias + ReLU on the VPU
    # Dropout is identity at inference.
    # TODO(synk): training-mode dropout (pltpu.prng_seed / prng_random_bits) not implemented.

    # Second linear (hidden -> 1) as a VPU multiply + sublane reduce (XLU):
    # avoids an N=1 MXU matmul and directly yields a lane-dense (1, TB) row.
    logits = jnp.sum(h * w2, axis=0, keepdims=True)          # (1, TB)
    o_ref[...] = (logits + b2_ref[0, 0]).astype(o_ref.dtype)


def _choose_tiles(B, block_b):
    """Balanced, 128-aligned batch tiles; even tile count for v7x's 2 TCs."""
    num_tiles = -(-B // block_b)                  # cdiv
    if num_tiles == 1 and B > 512:
        num_tiles = 2                             # keep both v7x TensorCores busy
    if num_tiles > 1 and num_tiles % 2:
        num_tiles += 1                            # even count shards megacore evenly
    tb = _round_up(-(-B // num_tiles), 128)       # lane-aligned balanced tile
    return tb, num_tiles, tb * num_tiles


def binary_classification_forward(x, w1, b1, w2, b2, *, block_b=8192):
    """x: (B, input_dim) f32; PyTorch-layout params:
       w1 (H, D), b1 (H,), w2 (1, H), b2 (1,).  Returns logits (B, 1) f32.

    Batch is tiled along a "parallel" grid axis.  At block_b=8192 the per-step
    VMEM is ~1 MiB of double-buffered bf16 x tiles plus a ~4 MiB (H, TB) f32
    intermediate — under the 16 MiB scoped default on v5e/v6e/v7x.  Raising
    block_b beyond this needs pltpu.CompilerParams(vmem_limit_bytes=...).
    """
    B, D = x.shape
    H = w1.shape[0]

    tb, num_tiles, b_padded = _choose_tiles(B, block_b)

    # Feature-major, bf16 x tile: lane-dense (D, TB), half the HBM traffic.
    xt = x.T.astype(jnp.bfloat16)                              # (D, B)
    if b_padded != B:
        xt = jnp.pad(xt, ((0, 0), (0, b_padded - B)))

    w1_bf16 = w1.astype(jnp.bfloat16)                          # (H, D)
    b1w2 = jnp.stack(
        [b1.astype(jnp.float32), w2.reshape(-1).astype(jnp.float32)], axis=-1
    )                                                          # (H, 2)
    b2_smem = jnp.reshape(b2, (1, 1)).astype(jnp.float32)      # (1, 1)

    out = pl.pallas_call(
        mlp_kernel,
        out_shape=jax.ShapeDtypeStruct((1, b_padded), jnp.float32),
        grid=(num_tiles,),
        in_specs=[
            pl.BlockSpec((D, tb), lambda i: (0, i)),            # x: one batch tile/step
            pl.BlockSpec((H, D), lambda i: (0, 0)),             # w1: resident
            pl.BlockSpec((H, 2), lambda i: (0, 0)),             # packed b1 / w2: resident
            pl.BlockSpec(memory_space=pltpu.MemorySpace.SMEM),  # b2 scalar in SMEM
        ],
        out_specs=pl.BlockSpec((1, tb), lambda i: (0, i)),      # lane-dense logits
        compiler_params=pltpu.CompilerParams(
            dimension_semantics=("parallel",),
        ),
    )(xt, w1_bf16, b1w2, b2_smem)

    return out[0, :B, None]                                     # (B, 1)


def init_params(key, input_dim, hidden_dim):
    """nn.Linear-style init (uniform +-1/sqrt(fan_in)) in PyTorch layouts:
    w1 (H, D), b1 (H,), w2 (1, H), b2 (1,)."""
    k1, k2, k3, k4 = jax.random.split(key, 4)
    lim1 = 1.0 / jnp.sqrt(jnp.float32(input_dim))
    lim2 = 1.0 / jnp.sqrt(jnp.float32(hidden_dim))
    w1 = jax.random.uniform(k1, (hidden_dim, input_dim), jnp.float32, -lim1, lim1)
    b1 = jax.random.uniform(k2, (hidden_dim,), jnp.float32, -lim1, lim1)
    w2 = jax.random.uniform(k3, (1, hidden_dim), jnp.float32, -lim2, lim2)
    b2 = jax.random.uniform(k4, (1,), jnp.float32, -lim2, lim2)
    return w1, b1, w2, b2


if __name__ == "__main__":
    input_dim = 32
    hidden_dim = 128

    key = jax.random.PRNGKey(0)
    kx, kp, kx2 = jax.random.split(key, 3)
    w1, b1, w2, b2 = init_params(kp, input_dim, hidden_dim)

    def reference(xv):
        h = jnp.maximum(xv @ w1.T + b1[None, :], 0.0)
        return h @ w2.T + b2[None, :]                           # (B, 1)

    # bf16 inputs inside the kernel -> loosened tolerance vs. the f32 reference.
    tol = dict(atol=2e-2, rtol=2e-2)

    # Small single-tile case (one grid step, B padded to one 128-lane tile).
    x = jax.random.normal(kx, (8, input_dim), jnp.float32)
    logits = binary_classification_forward(x, w1, b1, w2, b2)
    jax.block_until_ready(logits)
    assert logits.shape == (8, 1)
    assert jnp.allclose(logits, reference(x), **tol)

    # Multi-tile case: B=1300 forces 2 balanced 128-aligned tiles (tb=768),
    # exercising the parallel batch grid and the padding path.
    x2 = jax.random.normal(kx2, (1300, input_dim), jnp.float32)
    logits2 = binary_classification_forward(x2, w1, b1, w2, b2)
    jax.block_until_ready(logits2)
    assert logits2.shape == (1300, 1)
    assert jnp.allclose(logits2, reference(x2), **tol)

    print("KERNEL_OK")
</pallas_src>

<mosaic_0001>
module attributes {stable_mosaic.version = 11 : i64} {
  func.func @mlp_kernel(%arg0: i32, %arg1: memref<32x128xbf16, #tpu.memory_space<vmem>>, %arg2: memref<128x32xbf16, #tpu.memory_space<vmem>>, %arg3: memref<128x2xf32, #tpu.memory_space<vmem>>, %arg4: memref<1x1xf32, #tpu.memory_space<smem>>, %arg5: memref<1x128xf32, #tpu.memory_space<vmem>>) attributes {dimension_semantics = [#tpu.dimension_semantics<parallel>], iteration_bounds = array<i64: 1>, scalar_prefetch = 0 : i64, scratch_operands = 0 : i64, tpu.core_type = #tpu.core_type<tc>, window_params = [{transform_indices = @transform_0, window_bounds = array<i64: 32, 128>}, {pipeline_mode = #tpu.pipeline_mode<synchronous>, transform_indices = @transform_1, window_bounds = array<i64: 128, 32>}, {pipeline_mode = #tpu.pipeline_mode<synchronous>, transform_indices = @transform_2, window_bounds = array<i64: 128, 2>}, {transform_indices = @transform_3, window_bounds = array<i64: 1, 1>}, {transform_indices = @transform_4, window_bounds = array<i64: 1, 128>}]} {
    %c0 = arith.constant 0 : index
    %c0_0 = arith.constant 0 : index
    %0 = vector.load %arg2[%c0, %c0_0] : memref<128x32xbf16, #tpu.memory_space<vmem>>, vector<128x32xbf16>
    %c0_1 = arith.constant 0 : index
    %c0_2 = arith.constant 0 : index
    %1 = vector.load %arg1[%c0_1, %c0_2] : memref<32x128xbf16, #tpu.memory_space<vmem>>, vector<32x128xbf16>
    %cst = arith.constant dense<0.000000e+00> : vector<128x128xf32>
    %2 = tpu.matmul %0, %1, %cst {dimension_numbers = #tpu.dot_dimension_numbers<[1], [0], [0], [1], [0, 0, 1, 1], [], []>} : vector<128x32xbf16>, vector<32x128xbf16>, vector<128x128xf32> -> vector<128x128xf32>
    %c0_3 = arith.constant 0 : index
    %c0_4 = arith.constant 0 : index
    %3 = vector.load %arg3[%c0_3, %c0_4] : memref<128x2xf32, #tpu.memory_space<vmem>>, vector<128x1xf32>
    %c0_5 = arith.constant 0 : index
    %c1 = arith.constant 1 : index
    %4 = vector.load %arg3[%c0_5, %c1] : memref<128x2xf32, #tpu.memory_space<vmem>>, vector<128x1xf32>
    %5 = vector.broadcast %3 : vector<128x1xf32> to vector<128x128xf32>
    %6 = arith.addf %2, %5 : vector<128x128xf32>
    %cst_6 = arith.constant 0.000000e+00 : f32
    %7 = vector.broadcast %cst_6 : f32 to vector<128x128xf32>
    %8 = arith.maximumf %6, %7 : vector<128x128xf32>
    %9 = vector.broadcast %4 : vector<128x1xf32> to vector<128x128xf32>
    %10 = arith.mulf %8, %9 : vector<128x128xf32>
    %cst_7 = arith.constant dense<0.000000e+00> : vector<128xf32>
    %11 = vector.multi_reduction <add>, %10, %cst_7 [0] : vector<128x128xf32> to vector<128xf32>
    %12 = vector.shape_cast %11 : vector<128xf32> to vector<1x128xf32>
    %c0_8 = arith.constant 0 : index
    %c0_9 = arith.constant 0 : index
    %13 = memref.load %arg4[%c0_8, %c0_9] : memref<1x1xf32, #tpu.memory_space<smem>>
    %14 = vector.broadcast %13 : f32 to vector<1x128xf32>
    %15 = arith.addf %12, %14 : vector<1x128xf32>
    %c0_10 = arith.constant 0 : index
    %c0_11 = arith.constant 0 : index
    %16 = vector.load %arg5[%c0_10, %c0_11] : memref<1x128xf32, #tpu.memory_space<vmem>>, vector<1x128xf32>
    tpu.vector_store %arg5[%c0_10, %c0_11], %15 {strides = array<i32>} : memref<1x128xf32, #tpu.memory_space<vmem>>, vector<1x128xf32>,
    return
  }
  func.func @transform_0(%arg0: i32) -> (i32, i32) {
    %c0_i32 = arith.constant 0 : i32
    %c0_i32_0 = arith.constant 0 : i32
    return %c0_i32, %arg0 : i32, i32
  }
  func.func @transform_1(%arg0: i32) -> (i32, i32) {
    %c0_i32 = arith.constant 0 : i32
    %c0_i32_0 = arith.constant 0 : i32
    %c0_i32_1 = arith.constant 0 : i32
    return %c0_i32, %c0_i32_0 : i32, i32
  }
  func.func @transform_2(%arg0: i32) -> (i32, i32) {
    %c0_i32 = arith.constant 0 : i32
    %c0_i32_0 = arith.constant 0 : i32
    %c0_i32_1 = arith.constant 0 : i32
    return %c0_i32, %c0_i32_0 : i32, i32
  }
  func.func @transform_3(%arg0: i32) -> (i32, i32) {
    %c0_i32 = arith.constant 0 : i32
    %c0_i32_0 = arith.constant 0 : i32
    %c0_i32_1 = arith.constant 0 : i32
    return %c0_i32, %c0_i32_0 : i32, i32
  }
  func.func @transform_4(%arg0: i32) -> (i32, i32) {
    %c0_i32 = arith.constant 0 : i32
    %c0_i32_0 = arith.constant 0 : i32
    return %c0_i32, %arg0 : i32, i32
  }
}

</mosaic_0001>

<llo_original>
// kernel: tpu_custom_call.1
$region0: #{tpu_custom_call.1}
  #allocation0 [shape = 'u32[]', space=smem, size = 0x4, offset = 0x4, fixed_abs, tag = 'smem constant byte address 0x4 - core index']
  #allocation1 [shape = 'u32[72,128]{1,0:T(1,128)}', space=vmem, size = 0x9000, scoped, tag = 'internal scratch']
  #allocation2 [shape = 'f32[1,1]{1,0:T(1,128)S(6)}', space=smem, size = 0x200, scoped, tag = 'scoped memory for tpu_custom_call.1']
  %s0 = inlined_call_operand.vmem [shape: bf16[32,128], index: 0, kind: input, shape index: {}]
  %s1 = inlined_call_operand.vmem [shape: bf16[128,32], index: 1, kind: input, shape index: {}]
  %s2 = inlined_call_operand.vmem [shape: f32[128,2], index: 2, kind: input, shape index: {}]
  %s3 = inlined_call_operand.<no memory space> [shape: f32[1,1], index: 3, kind: input, shape index: {}]
  %s4 = inlined_call_operand.hbm [shape: f32[1,128], index: 4, kind: output, shape index: {}]
  %s5 = sld [smem:[#allocation0]]
  $region26: #{tpu_custom_call.1} parent=0
    _
  %s7 = ssub.s32 1, %s5
  %s8 = scalar_select 0, %s7, %s5
  %9 = sst [smem:[#allocation2]] %s3
  $region1: #{tpu_custom_call.1} parent=0
    #allocation3 [shape = 'u8[512]{0}', space=vmem, size = 0x400, scoped, tag = 'output window, operand 0, single buffered']
    #allocation4 [shape = 's32[1]{0}', space=sflag, size = 0x4, scoped, tag = 'scoped memory for tpu_custom_call.1']
    %10 = vsyncpa [#allocation4], 0
    // Predicated region
    $region2: #{tpu_custom_call.1} parent=1 // pred_check
      _
    $region3: #{tpu_custom_call.1} parent=1 // pred_check_branch
      %12 = sbr.rel (0) target = $region5
    $region4: #{tpu_custom_call.1} parent=1 // pred_region
      _
    $region5: #{tpu_custom_call.1} parent=1 // pred_fallthru
      _
    // Predicated region
    $region6: #{tpu_custom_call.1} parent=1 // pred_check
      _
    $region7: #{tpu_custom_call.1} parent=1 // pred_check_branch
      %14 = sbr.rel (0) target = $region9
    $region8: #{tpu_custom_call.1} parent=1 // pred_region
      _
    $region9: #{tpu_custom_call.1} parent=1 // pred_fallthru
      _
    // Predicated region
    $region10: #{tpu_custom_call.1} parent=1 // pred_check
      _
    $region11: #{tpu_custom_call.1} parent=1 // pred_check_branch
      %16 = sbr.rel (0) target = $region13
    $region12: #{tpu_custom_call.1} parent=1 // pred_region
      _
    $region13: #{tpu_custom_call.1} parent=1 // pred_fallthru
      _
    // Predicated region
    $region14: #{tpu_custom_call.1} parent=1 // pred_check
      _
    $region15: #{tpu_custom_call.1} parent=1 // pred_check_branch
      %18 = sbr.rel (0) target = $region17
    $region16: #{tpu_custom_call.1} parent=1 // pred_region
      _
    $region17: #{tpu_custom_call.1} parent=1 // pred_fallthru
      _
    %v20 = vld [vmem:[%s1] sm:$0xf]
    %v21 = vld [vmem:[%s1 + $0x4] sm:$0xf]
    %v22 = vld [vmem:[%s1 + $0x8] sm:$0xf]
    %v23 = vld [vmem:[%s1 + $0xc] sm:$0xf]
    %v24 = vld [vmem:[%s1 + $0x10] sm:$0xf]
    %v25 = vld [vmem:[%s1 + $0x14] sm:$0xf]
    %v26 = vld [vmem:[%s1 + $0x18] sm:$0xf]
    %v27 = vld [vmem:[%s1 + $0x1c] sm:$0xf]
    %v28 = vld [vmem:[%s1 + $0x20] sm:$0xf]
    %v29 = vld [vmem:[%s1 + $0x24] sm:$0xf]
    %v30 = vld [vmem:[%s1 + $0x28] sm:$0xf]
    %v31 = vld [vmem:[%s1 + $0x2c] sm:$0xf]
    %v32 = vld [vmem:[%s1 + $0x30] sm:$0xf]
    %v33 = vld [vmem:[%s1 + $0x34] sm:$0xf]
    %v34 = vld [vmem:[%s1 + $0x38] sm:$0xf]
    %v35 = vld [vmem:[%s1 + $0x3c] sm:$0xf]
    %v36 = vld [vmem:[%s0] sm:$0xf]
    %v37 = vld [vmem:[%s0 + $0x4] sm:$0xf]
    %v38 = vld [vmem:[%s0 + $0x8] sm:$0xf]
    %v39 = vld [vmem:[%s0 + $0xc] sm:$0xf]
    %v40 = vld [vmem:[%s2] sm:$0xff]
    %v41 = vld [vmem:[%s2 + $0x8] sm:$0xff]
    %v42 = vld [vmem:[%s2 + $0x10] sm:$0xff]
    %v43 = vld [vmem:[%s2 + $0x18] sm:$0xff]
    %v44 = vld [vmem:[%s2 + $0x20] sm:$0xff]
    %v45 = vld [vmem:[%s2 + $0x28] sm:$0xff]
    %v46 = vld [vmem:[%s2 + $0x30] sm:$0xff]
    %v47 = vld [vmem:[%s2 + $0x38] sm:$0xff]
    %v48 = vld [vmem:[%s2 + $0x40] sm:$0xff]
    %v49 = vld [vmem:[%s2 + $0x48] sm:$0xff]
    %v50 = vld [vmem:[%s2 + $0x50] sm:$0xff]
    %v51 = vld [vmem:[%s2 + $0x58] sm:$0xff]
    %v52 = vld [vmem:[%s2 + $0x60] sm:$0xff]
    %v53 = vld [vmem:[%s2 + $0x68] sm:$0xff]
    %v54 = vld [vmem:[%s2 + $0x70] sm:$0xff]
    %v55 = vld [vmem:[%s2 + $0x78] sm:$0xff]
    %57 = vset.pattern.permute.xlu0 0
    %58 = vperm.xlu0 %57, %v40
    %v59 = vpop.permute.xlu0 %58
    %62 = vset.pattern.permute.xlu0 0
    %63 = vperm.xlu0 %62, %v41
    %v64 = vpop.permute.xlu0 %63
    %67 = vset.pattern.permute.xlu0 0
    %68 = vperm.xlu0 %67, %v42
    %v69 = vpop.permute.xlu0 %68
    %72 = vset.pattern.permute.xlu0 0
    %73 = vperm.xlu0 %72, %v43
    %v74 = vpop.permute.xlu0 %73
    %77 = vset.pattern.permute.xlu0 0
    %78 = vperm.xlu0 %77, %v44
    %v79 = vpop.permute.xlu0 %78
    %82 = vset.pattern.permute.xlu0 0
    %83 = vperm.xlu0 %82, %v45
    %v84 = vpop.permute.xlu0 %83
    %87 = vset.pattern.permute.xlu0 0
    %88 = vperm.xlu0 %87, %v46
    %v89 = vpop.permute.xlu0 %88
    %92 = vset.pattern.permute.xlu0 0
    %93 = vperm.xlu0 %92, %v47
    %v94 = vpop.permute.xlu0 %93
    %97 = vset.pattern.permute.xlu0 0
    %98 = vperm.xlu0 %97, %v48
    %v99 = vpop.permute.xlu0 %98
    %102 = vset.pattern.permute.xlu0 0
    %103 = vperm.xlu0 %102, %v49
    %v104 = vpop.permute.xlu0 %103
    %107 = vset.pattern.permute.xlu0 0
    %108 = vperm.xlu0 %107, %v50
    %v109 = vpop.permute.xlu0 %108
    %112 = vset.pattern.permute.xlu0 0
    %113 = vperm.xlu0 %112, %v51
    %v114 = vpop.permute.xlu0 %113
    %117 = vset.pattern.permute.xlu0 0
    %118 = vperm.xlu0 %117, %v52
    %v119 = vpop.permute.xlu0 %118
    %122 = vset.pattern.permute.xlu0 0
    %123 = vperm.xlu0 %122, %v53
    %v124 = vpop.permute.xlu0 %123
    %127 = vset.pattern.permute.xlu0 0
    %128 = vperm.xlu0 %127, %v54
    %v129 = vpop.permute.xlu0 %128
    %132 = vset.pattern.permute.xlu0 0
    %133 = vperm.xlu0 %132, %v55
    %v134 = vpop.permute.xlu0 %133
    %v152 = vunpack.c.l.b16 %v20
    %v153 = vunpack.c.l.b16 %v21
    %v154 = vunpack.c.l.b16 %v22
    %v155 = vunpack.c.l.b16 %v23
    %v156 = vunpack.c.l.b16 %v24
    %v157 = vunpack.c.l.b16 %v25
    %v158 = vunpack.c.l.b16 %v26
    %v159 = vunpack.c.l.b16 %v27
    %v160 = vunpack.c.l.b16 %v28
    %v161 = vunpack.c.l.b16 %v29
    %v162 = vunpack.c.l.b16 %v30
    %v163 = vunpack.c.l.b16 %v31
    %v164 = vunpack.c.l.b16 %v32
    %v165 = vunpack.c.l.b16 %v33
    %v166 = vunpack.c.l.b16 %v34
    %v167 = vunpack.c.l.b16 %v35
    %v168 = vpack.c.b16 %v153, %v152
    %v169 = vpack.c.b16 %v155, %v154
    %v170 = vpack.c.b16 %v157, %v156
    %v171 = vpack.c.b16 %v159, %v158
    %v172 = vpack.c.b16 %v161, %v160
    %v173 = vpack.c.b16 %v163, %v162
    %v174 = vpack.c.b16 %v165, %v164
    %v175 = vpack.c.b16 %v167, %v166
    %v180 = vunpack.c.l.b16 %v36
    %v181 = vunpack.c.l.b16 %v37
    %v182 = vunpack.c.l.b16 %v38
    %v183 = vunpack.c.l.b16 %v39
    %v184 = vpack.c.b16 %v181, %v180
    %v185 = vpack.c.b16 %v183, %v182
    %vm188 = vcmask 261120
    %v190 = vsel %vm188, %v168, 0
    %v193 = vsel %vm188, %v169, 0
    %v196 = vsel %vm188, %v170, 0
    %v199 = vsel %vm188, %v171, 0
    %v202 = vsel %vm188, %v172, 0
    %v205 = vsel %vm188, %v173, 0
    %v208 = vsel %vm188, %v174, 0
    %v211 = vsel %vm188, %v175, 0
    %213 = vmatpush.bf16.msra.mxu0 0
    %214 = vmatpush.bf16.msra.mxu0 0
    %215 = vmatpush.bf16.msra.mxu0 0
    %216 = vmatpush.bf16.msra.mxu0 0
    %217 = vmatpush.bf16.msra.mxu0 0
    %218 = vmatpush.bf16.msra.mxu0 0
    %219 = vmatpush.bf16.msra.mxu0 %v185
    %220 = vmatpush.bf16.msra.mxu0 %v184
    %221 = vmatmul.bf16.gmra.mxu0 %v190
    %v222 = vpop.f32.mrf.mxu0
    %v223 = vadd.f32 %v59, %v222
    %v224 = vpop.f32.mrf.mxu0
    %v225 = vadd.f32 %v64, %v224
    %226 = vmatmul.bf16.gmra.mxu0 %v193
    %v227 = vpop.f32.mrf.mxu0
    %v228 = vadd.f32 %v69, %v227
    %v229 = vpop.f32.mrf.mxu0
    %v230 = vadd.f32 %v74, %v229
    %231 = vmatmul.bf16.gmra.mxu0 %v196
    %v232 = vpop.f32.mrf.mxu0
    %v233 = vadd.f32 %v79, %v232
    %v234 = vpop.f32.mrf.mxu0
    %v235 = vadd.f32 %v84, %v234
    %236 = vmatmul.bf16.gmra.mxu0 %v199
    %v237 = vpop.f32.mrf.mxu0
    %v238 = vadd.f32 %v89, %v237
    %v239 = vpop.f32.mrf.mxu0
    %v240 = vadd.f32 %v94, %v239
    %241 = vmatmul.bf16.gmra.mxu0 %v202
    %v242 = vpop.f32.mrf.mxu0
    %v243 = vadd.f32 %v99, %v242
    %v244 = vpop.f32.mrf.mxu0
    %v245 = vadd.f32 %v104, %v244
    %246 = vmatmul.bf16.gmra.mxu0 %v205
    %v247 = vpop.f32.mrf.mxu0
    %v248 = vadd.f32 %v109, %v247
    %v249 = vpop.f32.mrf.mxu0
    %v250 = vadd.f32 %v114, %v249
    %251 = vmatmul.bf16.gmra.mxu0 %v208
    %v252 = vpop.f32.mrf.mxu0
    %v253 = vadd.f32 %v119, %v252
    %v254 = vpop.f32.mrf.mxu0
    %v255 = vadd.f32 %v124, %v254
    %256 = vmatmul.bf16.gmra.mxu0 %v211
    %v257 = vpop.f32.mrf.mxu0
    %v258 = vadd.f32 %v129, %v257
    %v259 = vpop.f32.mrf.mxu0
    %v260 = vadd.f32 %v134, %v259
    %261 = vdwg.mxu0
    %v262 = vmax.f32 %v223, 0.0
    %v263 = vmax.f32 %v225, 0.0
    %v264 = vmax.f32 %v228, 0.0
    %v265 = vmax.f32 %v230, 0.0
    %v266 = vmax.f32 %v233, 0.0
    %v267 = vmax.f32 %v235, 0.0
    %v268 = vmax.f32 %v238, 0.0
    %v269 = vmax.f32 %v240, 0.0
    %v270 = vmax.f32 %v243, 0.0
    %v271 = vmax.f32 %v245, 0.0
    %v272 = vmax.f32 %v248, 0.0
    %v273 = vmax.f32 %v250, 0.0
    %v274 = vmax.f32 %v253, 0.0
    %v275 = vmax.f32 %v255, 0.0
    %v276 = vmax.f32 %v258, 0.0
    %v277 = vmax.f32 %v260, 0.0
    %278 = vset.pattern.permute.xlu0 1
    %279 = vperm.xlu0 %278, %v40
    %v280 = vpop.permute.xlu0 %279
    %282 = vset.pattern.permute.xlu0 1
    %283 = vperm.xlu0 %282, %v41
    %v284 = vpop.permute.xlu0 %283
    %286 = vset.pattern.permute.xlu0 1
    %287 = vperm.xlu0 %286, %v42
    %v288 = vpop.permute.xlu0 %287
    %290 = vset.pattern.permute.xlu0 1
    %291 = vperm.xlu0 %290, %v43
    %v292 = vpop.permute.xlu0 %291
    %294 = vset.pattern.permute.xlu0 1
    %295 = vperm.xlu0 %294, %v44
    %v296 = vpop.permute.xlu0 %295
    %298 = vset.pattern.permute.xlu0 1
    %299 = vperm.xlu0 %298, %v45
    %v300 = vpop.permute.xlu0 %299
    %302 = vset.pattern.permute.xlu0 1
    %303 = vperm.xlu0 %302, %v46
    %v304 = vpop.permute.xlu0 %303
    %306 = vset.pattern.permute.xlu0 1
    %307 = vperm.xlu0 %306, %v47
    %v308 = vpop.permute.xlu0 %307
    %310 = vset.pattern.permute.xlu0 1
    %311 = vperm.xlu0 %310, %v48
    %v312 = vpop.permute.xlu0 %311
    %314 = vset.pattern.permute.xlu0 1
    %315 = vperm.xlu0 %314, %v49
    %v316 = vpop.permute.xlu0 %315
    %318 = vset.pattern.permute.xlu0 1
    %319 = vperm.xlu0 %318, %v50
    %v320 = vpop.permute.xlu0 %319
    %322 = vset.pattern.permute.xlu0 1
    %323 = vperm.xlu0 %322, %v51
    %v324 = vpop.permute.xlu0 %323
    %326 = vset.pattern.permute.xlu0 1
    %327 = vperm.xlu0 %326, %v52
    %v328 = vpop.permute.xlu0 %327
    %330 = vset.pattern.permute.xlu0 1
    %331 = vperm.xlu0 %330, %v53
    %v332 = vpop.permute.xlu0 %331
    %334 = vset.pattern.permute.xlu0 1
    %335 = vperm.xlu0 %334, %v54
    %v336 = vpop.permute.xlu0 %335
    %338 = vset.pattern.permute.xlu0 1
    %339 = vperm.xlu0 %338, %v55
    %v340 = vpop.permute.xlu0 %339
    %v342 = vmul.f32 %v262, %v280
    %v343 = vmul.f32 %v263, %v284
    %v344 = vmul.f32 %v264, %v288
    %v345 = vmul.f32 %v265, %v292
    %v346 = vmul.f32 %v266, %v296
    %v347 = vmul.f32 %v267, %v300
    %v348 = vmul.f32 %v268, %v304
    %v349 = vmul.f32 %v269, %v308
    %v350 = vmul.f32 %v270, %v312
    %v351 = vmul.f32 %v271, %v316
    %v352 = vmul.f32 %v272, %v320
    %v353 = vmul.f32 %v273, %v324
    %v354 = vmul.f32 %v274, %v328
    %v355 = vmul.f32 %v275, %v332
    %v356 = vmul.f32 %v276, %v336
    %v357 = vmul.f32 %v277, %v340
    %v358 = vadd.f32 %v342, %v343
    %v359 = vadd.f32 %v358, %v344
    %v360 = vadd.f32 %v359, %v345
    %v361 = vadd.f32 %v360, %v346
    %v362 = vadd.f32 %v361, %v347
    %v363 = vadd.f32 %v362, %v348
    %v364 = vadd.f32 %v363, %v349
    %v365 = vadd.f32 %v364, %v350
    %v366 = vadd.f32 %v365, %v351
    %v367 = vadd.f32 %v366, %v352
    %v368 = vadd.f32 %v367, %v353
    %v369 = vadd.f32 %v368, %v354
    %v370 = vadd.f32 %v369, %v355
    %v371 = vadd.f32 %v370, %v356
    %v372 = vadd.f32 %v371, %v357
    %v373 = vrot.slane %v372, 4
    %v374 = vadd.f32 %v372, %v373
    %v375 = vrot.slane %v374, 2
    %v376 = vadd.f32 %v374, %v375
    %v377 = vrot.slane %v376, 1
    %v378 = vadd.f32 %v376, %v377
    %s379 = sld [smem:[#allocation2]]
    %v380 = vstv %s379
    %v381 = vadd.f32 %v378, %v380
    %382 = vst [vmem:[#allocation3] sm:$0x1] %v381
    // Predicated region
    $region18: #{tpu_custom_call.1} parent=1 // pred_check
      _
    $region19: #{tpu_custom_call.1} parent=1 // pred_check_branch
      %384 = sbr.rel (0) target = $region21
    $region20: #{tpu_custom_call.1} parent=1 // pred_region
      %386 = vsyncadd [#allocation4], 0
      %s388 = sshll.u32 [#allocation3], 4
      %s389 = int_to_ptr.vmem [resolvable:$true] %s388
      %s390 = sshll.u32 %s4, 4
      %s391 = int_to_ptr.hbm [resolvable:$true] %s390
      %393 = dma.vmem_to_hbm [thread:$0]  %s389, 16, %s391, [#allocation4]
    $region21: #{tpu_custom_call.1} parent=1 // pred_fallthru
      _
    // Predicated region
    $region22: #{tpu_custom_call.1} parent=1 // pred_check
      _
    $region23: #{tpu_custom_call.1} parent=1 // pred_check_branch
      %395 = sbr.rel (0) target = $region25
    $region24: #{tpu_custom_call.1} parent=1 // pred_region
      %397 = dma.done [#allocation4], 16
    $region25: #{tpu_custom_call.1} parent=1 // pred_fallthru
      _
    %398 = vsyncpa [#allocation4], 1

</llo_original>
